<compile_context>
chip_gen: v7x
topology: tpu7x:2x2x1
jax: 0.10.0
libtpu: 0.0.40
codegen_flags: <defaults>
</compile_context>

<pallas_src>
import functools

import jax
import jax.numpy as jnp
from jax.experimental import pallas as pl
from jax.experimental.pallas import tpu as pltpu


def _round_up(n, m):
    return ((n + m - 1) // m) * m


def _cdiv(a, b):
    return (a + b - 1) // b


def _tile_bytes(rows, cols, itemsize):
    # Conservative VMEM tile size estimate: padded to (8, 128) granules.
    return _round_up(max(rows, 1), 8) * _round_up(max(cols, 1), 128) * itemsize


def _critic_kernel(x_ref, w1_ref, b1_ref, w2_ref, b2_ref, w3_ref, b3_ref, o_ref):
    # Layer 1: Linear(state_dim -> hidden) + ReLU. MXU matmul, f32 accumulation;
    # bias add + ReLU stay in f32 on the VPU.
    x = x_ref[...].astype(w1_ref.dtype)
    h1 = jnp.dot(x, w1_ref[...], preferred_element_type=jnp.float32)
    h1 = jnp.maximum(h1 + b1_ref[...], 0.0)

    # Layer 2: Linear(hidden -> hidden) + ReLU.
    h2 = jnp.dot(h1.astype(w2_ref.dtype), w2_ref[...],
                 preferred_element_type=jnp.float32)
    h2 = jnp.maximum(h2 + b2_ref[...], 0.0)

    # Layer 3: Linear(hidden -> 1), computed as w3_row (1,H) contracted with
    # h2 (TB,H) over H ("NT" matmul). The result lands natively as (1, TB) with the
    # batch on the lane axis -> lane-dense output block, unmasked full-width stores,
    # and no (TB,1)->(1,TB) relayout. b3 is a single SMEM scalar added on the
    # narrow (1, TB) result (no (TB,H) broadcast temporaries).
    v = jax.lax.dot_general(
        w3_ref[...], h2,
        dimension_numbers=(((1,), (1,)), ((), ())),
        preferred_element_type=jnp.float32,
    )
    o_ref[...] = (v + b3_ref[0]).astype(o_ref.dtype)


def _choose_batch_tile(batch, hidden, block_rows):
    # Lane-dense output blocks need the batch tile to be a multiple of 128 whenever
    # it does not cover the whole batch.
    tb = _round_up(max(int(block_rows), 128), 128)
    # Bound the per-step f32 intermediates (h1 + h2 ~= 8*hidden bytes per row) to
    # ~16 MiB so large-hidden critics still fit v7x's 64 MiB / v5e's scoped VMEM.
    cap = max(128, ((16 << 20) // max(8 * hidden, 1)) // 128 * 128)
    tb = min(tb, cap)
    # v7x megacore: guarantee >= 2 grid steps when the batch is big enough to be
    # worth splitting, so both TensorCores get work (harmless on 1-TC v5e/v6e).
    if batch > 256:
        tb = min(tb, _round_up(_cdiv(batch, 2), 128))
    if tb >= batch:
        # Single block covering the whole batch: block dims equal the full array
        # dims, so the (8,128) divisibility rule does not apply and there are no
        # padding rows at all.
        tb = batch
    return tb


@functools.partial(jax.jit, static_argnames=("block_rows", "compute_dtype"))
def critic_forward(state, params, *, block_rows=4096, compute_dtype=jnp.float32):
    """state: (B, state_dim); params dict w1,b1,w2,b2,w3,b3. Returns (B, 1) float32."""
    B, state_dim = state.shape
    hidden = params["w1"].shape[1]

    # Weights for the two MXU matmuls are cast ONCE here (not per grid step).
    # Biases, the layer-3 row and all accumulation stay in f32.
    w1 = params["w1"].astype(compute_dtype)
    w2 = params["w2"].astype(compute_dtype)
    b1 = params["b1"].reshape(1, hidden).astype(jnp.float32)
    b2 = params["b2"].reshape(1, hidden).astype(jnp.float32)
    w3 = params["w3"].reshape(1, hidden).astype(jnp.float32)   # row for the NT matmul
    b3 = params["b3"].reshape(1).astype(jnp.float32)            # scalar -> SMEM

    tb = _choose_batch_tile(B, hidden, block_rows)
    grid = (_cdiv(B, tb),)

    # Weights/biases are VMEM-resident (constant block index -> never re-DMAed).
    # For large hidden, single-buffer them: default double-buffering would waste
    # VMEM on blocks that never change (matters on v7x 64 MiB / v5e 16 MiB scoped).
    single_buffer_weights = hidden >= 1024
    if single_buffer_weights:
        resident = lambda shape: pl.BlockSpec(
            shape, lambda i: (0, 0), pipeline_mode=pl.Buffered(1))
    else:
        resident = lambda shape: pl.BlockSpec(shape, lambda i: (0, 0))
    # TODO(synk): for very large hidden (>~2.8K f32 on v7x, >~1.4K on v5e's default
    # scoped VMEM) the resident (H,H) weight no longer fits; tile w2 over an extra
    # "arbitrary" reduction grid axis instead of holding it fully resident.

    # Explicit VMEM budget from the real footprint (+ headroom for compiler scratch
    # and matmul temporaries), per review — avoids spurious scoped-VMEM OOM.
    w_isz = jnp.dtype(compute_dtype).itemsize
    x_isz = jnp.dtype(state.dtype).itemsize
    n_wbuf = 1 if single_buffer_weights else 2
    footprint = (
        n_wbuf * (_tile_bytes(state_dim, hidden, w_isz)
                  + _tile_bytes(hidden, hidden, w_isz)
                  + 3 * _tile_bytes(1, hidden, 4))
        + 2 * _tile_bytes(tb, state_dim, x_isz)      # double-buffered x stream
        + 2 * _tile_bytes(1, tb, 4)                  # double-buffered output row
        + 3 * _tile_bytes(tb, hidden, 4)             # h1 / h2 / cast temporaries
    )
    vmem_limit = int(min(footprint + (8 << 20), 128 << 20))

    flops = 2 * B * (state_dim * hidden + hidden * hidden + hidden)
    bytes_accessed = (
        B * state_dim * x_isz + B * 4
        + (state_dim * hidden + hidden * hidden) * w_isz
        + (3 * hidden + 1) * 4
    )

    out_row = pl.pallas_call(
        _critic_kernel,
        out_shape=jax.ShapeDtypeStruct((1, B), jnp.float32),   # lane-dense output
        grid=grid,
        in_specs=[
            pl.BlockSpec((tb, state_dim), lambda i: (i, 0)),   # x: streamed blocks
            resident((state_dim, hidden)),                     # w1 (resident)
            resident((1, hidden)),                             # b1 (resident)
            resident((hidden, hidden)),                        # w2 (resident)
            resident((1, hidden)),                             # b2 (resident)
            resident((1, hidden)),                             # w3 row (resident)
            pl.BlockSpec(memory_space=pltpu.SMEM),             # b3 scalar in SMEM
        ],
        out_specs=pl.BlockSpec((1, tb), lambda i: (0, i)),     # batch on lanes
        compiler_params=pltpu.CompilerParams(
            dimension_semantics=("parallel",),
            vmem_limit_bytes=vmem_limit,
        ),
        cost_estimate=pl.CostEstimate(
            flops=flops, transcendentals=0, bytes_accessed=bytes_accessed
        ),
    )(state, w1, b1, w2, b2, w3, b3)

    # (1, B) and (B, 1) share the same row-major element order -> free reshape.
    return out_row.reshape(B, 1)


def init_critic_params(key, state_dim, hidden_dim):
    """Deterministic PyTorch-style init: U(-1/sqrt(fan_in), 1/sqrt(fan_in))."""
    ks = jax.random.split(key, 6)

    def lin(kw, kb, fan_in, fan_out):
        bound = 1.0 / jnp.sqrt(fan_in)
        w = jax.random.uniform(kw, (fan_in, fan_out), jnp.float32, -bound, bound)
        b = jax.random.uniform(kb, (1, fan_out), jnp.float32, -bound, bound)
        return w, b

    w1, b1 = lin(ks[0], ks[1], state_dim, hidden_dim)
    w2, b2 = lin(ks[2], ks[3], hidden_dim, hidden_dim)
    w3, b3 = lin(ks[4], ks[5], hidden_dim, 1)
    return {"w1": w1, "b1": b1, "w2": w2, "b2": b2, "w3": w3, "b3": b3}


if __name__ == "__main__":
    key = jax.random.PRNGKey(0)
    k_param, k_state, k_state2 = jax.random.split(key, 3)

    state_dim, hidden_dim = 16, 32
    params = init_critic_params(k_param, state_dim, hidden_dim)

    def ref_forward(s):
        h = jnp.maximum(s @ params["w1"] + params["b1"], 0.0)
        h = jnp.maximum(h @ params["w2"] + params["b2"], 0.0)
        return h @ params["w3"] + params["b3"]

    # Small batch: single grid step (block shapes equal the full array dims).
    state = jax.random.normal(k_state, (8, state_dim), jnp.float32)
    value = critic_forward(state, params)
    jax.block_until_ready(value)
    ref = ref_forward(state)
    assert value.shape == (8, 1)
    assert jnp.allclose(value, ref, atol=1e-5, rtol=1e-5)

    # Multi-step grid with a ragged final block: exercises the lane-dense (1, TB)
    # output tiling, edge-block masking and the >=2-step (v7x megacore) path.
    state2 = jax.random.normal(k_state2, (300, state_dim), jnp.float32)
    value2 = critic_forward(state2, params)
    jax.block_until_ready(value2)
    assert value2.shape == (300, 1)
    assert jnp.allclose(value2, ref_forward(state2), atol=1e-5, rtol=1e-5)

    # bf16 MXU-input path (f32 accumulation) — looser tolerance since error
    # compounds across the two bf16 matmuls vs the f32 reference.
    value_bf16 = critic_forward(state, params, compute_dtype=jnp.bfloat16)
    jax.block_until_ready(value_bf16)
    assert jnp.allclose(value_bf16, ref, atol=5e-2, rtol=5e-2)

    print("KERNEL_OK")
</pallas_src>

<mosaic_0001>
module attributes {stable_mosaic.version = 11 : i64} {
  func.func @_critic_kernel(%arg0: i32, %arg1: memref<8x16xf32, #tpu.memory_space<vmem>>, %arg2: memref<16x32xf32, #tpu.memory_space<vmem>>, %arg3: memref<1x32xf32, #tpu.memory_space<vmem>>, %arg4: memref<32x32xf32, #tpu.memory_space<vmem>>, %arg5: memref<1x32xf32, #tpu.memory_space<vmem>>, %arg6: memref<1x32xf32, #tpu.memory_space<vmem>>, %arg7: memref<1xf32, #tpu.memory_space<smem>>, %arg8: memref<1x8xf32, #tpu.memory_space<vmem>>) attributes {dimension_semantics = [#tpu.dimension_semantics<parallel>], iteration_bounds = array<i64: 1>, scalar_prefetch = 0 : i64, scratch_operands = 0 : i64, tpu.core_type = #tpu.core_type<tc>, window_params = [{transform_indices = @transform_0, window_bounds = array<i64: 8, 16>}, {pipeline_mode = #tpu.pipeline_mode<synchronous>, transform_indices = @transform_1, window_bounds = array<i64: 16, 32>}, {pipeline_mode = #tpu.pipeline_mode<synchronous>, transform_indices = @transform_2, window_bounds = array<i64: 1, 32>}, {pipeline_mode = #tpu.pipeline_mode<synchronous>, transform_indices = @transform_3, window_bounds = array<i64: 32, 32>}, {pipeline_mode = #tpu.pipeline_mode<synchronous>, transform_indices = @transform_4, window_bounds = array<i64: 1, 32>}, {pipeline_mode = #tpu.pipeline_mode<synchronous>, transform_indices = @transform_5, window_bounds = array<i64: 1, 32>}, {transform_indices = @transform_6, window_bounds = array<i64: 1>}, {transform_indices = @transform_7, window_bounds = array<i64: 1, 8>}]} {
    %c0 = arith.constant 0 : index
    %c0_0 = arith.constant 0 : index
    %0 = vector.load %arg1[%c0, %c0_0] : memref<8x16xf32, #tpu.memory_space<vmem>>, vector<8x16xf32>
    %c0_1 = arith.constant 0 : index
    %c0_2 = arith.constant 0 : index
    %1 = vector.load %arg2[%c0_1, %c0_2] : memref<16x32xf32, #tpu.memory_space<vmem>>, vector<16x32xf32>
    %cst = arith.constant dense<0.000000e+00> : vector<8x32xf32>
    %2 = tpu.matmul %0, %1, %cst {dimension_numbers = #tpu.dot_dimension_numbers<[1], [0], [0], [1], [0, 0, 1, 1], [], []>} : vector<8x16xf32>, vector<16x32xf32>, vector<8x32xf32> -> vector<8x32xf32>
    %c0_3 = arith.constant 0 : index
    %c0_4 = arith.constant 0 : index
    %3 = vector.load %arg3[%c0_3, %c0_4] : memref<1x32xf32, #tpu.memory_space<vmem>>, vector<1x32xf32>
    %4 = vector.broadcast %3 : vector<1x32xf32> to vector<8x32xf32>
    %5 = arith.addf %2, %4 : vector<8x32xf32>
    %cst_5 = arith.constant 0.000000e+00 : f32
    %6 = vector.broadcast %cst_5 : f32 to vector<8x32xf32>
    %7 = arith.maximumf %5, %6 : vector<8x32xf32>
    %c0_6 = arith.constant 0 : index
    %c0_7 = arith.constant 0 : index
    %8 = vector.load %arg4[%c0_6, %c0_7] : memref<32x32xf32, #tpu.memory_space<vmem>>, vector<32x32xf32>
    %cst_8 = arith.constant dense<0.000000e+00> : vector<8x32xf32>
    %9 = tpu.matmul %7, %8, %cst_8 {dimension_numbers = #tpu.dot_dimension_numbers<[1], [0], [0], [1], [0, 0, 1, 1], [], []>} : vector<8x32xf32>, vector<32x32xf32>, vector<8x32xf32> -> vector<8x32xf32>
    %c0_9 = arith.constant 0 : index
    %c0_10 = arith.constant 0 : index
    %10 = vector.load %arg5[%c0_9, %c0_10] : memref<1x32xf32, #tpu.memory_space<vmem>>, vector<1x32xf32>
    %11 = vector.broadcast %10 : vector<1x32xf32> to vector<8x32xf32>
    %12 = arith.addf %9, %11 : vector<8x32xf32>
    %cst_11 = arith.constant 0.000000e+00 : f32
    %13 = vector.broadcast %cst_11 : f32 to vector<8x32xf32>
    %14 = arith.maximumf %12, %13 : vector<8x32xf32>
    %c0_12 = arith.constant 0 : index
    %c0_13 = arith.constant 0 : index
    %15 = vector.load %arg6[%c0_12, %c0_13] : memref<1x32xf32, #tpu.memory_space<vmem>>, vector<1x32xf32>
    %cst_14 = arith.constant dense<0.000000e+00> : vector<1x8xf32>
    %16 = tpu.matmul %15, %14, %cst_14 {dimension_numbers = #tpu.dot_dimension_numbers<[1], [1], [0], [0], [0, 0, 1, 0], [], []>} : vector<1x32xf32>, vector<8x32xf32>, vector<1x8xf32> -> vector<1x8xf32>
    %c0_15 = arith.constant 0 : index
    %17 = memref.load %arg7[%c0_15] : memref<1xf32, #tpu.memory_space<smem>>
    %18 = vector.broadcast %17 : f32 to vector<1x8xf32>
    %19 = arith.addf %16, %18 : vector<1x8xf32>
    %c0_16 = arith.constant 0 : index
    %c0_17 = arith.constant 0 : index
    %20 = vector.load %arg8[%c0_16, %c0_17] : memref<1x8xf32, #tpu.memory_space<vmem>>, vector<1x8xf32>
    tpu.vector_store %arg8[%c0_16, %c0_17], %19 {strides = array<i32>} : memref<1x8xf32, #tpu.memory_space<vmem>>, vector<1x8xf32>,
    return
  }
  func.func @transform_0(%arg0: i32) -> (i32, i32) {
    %c0_i32 = arith.constant 0 : i32
    %c0_i32_0 = arith.constant 0 : i32
    return %arg0, %c0_i32 : i32, i32
  }
  func.func @transform_1(%arg0: i32) -> (i32, i32) {
    %c0_i32 = arith.constant 0 : i32
    %c0_i32_0 = arith.constant 0 : i32
    %c0_i32_1 = arith.constant 0 : i32
    return %c0_i32, %c0_i32_0 : i32, i32
  }
  func.func @transform_2(%arg0: i32) -> (i32, i32) {
    %c0_i32 = arith.constant 0 : i32
    %c0_i32_0 = arith.constant 0 : i32
    %c0_i32_1 = arith.constant 0 : i32
    return %c0_i32, %c0_i32_0 : i32, i32
  }
  func.func @transform_3(%arg0: i32) -> (i32, i32) {
    %c0_i32 = arith.constant 0 : i32
    %c0_i32_0 = arith.constant 0 : i32
    %c0_i32_1 = arith.constant 0 : i32
    return %c0_i32, %c0_i32_0 : i32, i32
  }
  func.func @transform_4(%arg0: i32) -> (i32, i32) {
    %c0_i32 = arith.constant 0 : i32
    %c0_i32_0 = arith.constant 0 : i32
    %c0_i32_1 = arith.constant 0 : i32
    return %c0_i32, %c0_i32_0 : i32, i32
  }
  func.func @transform_5(%arg0: i32) -> (i32, i32) {
    %c0_i32 = arith.constant 0 : i32
    %c0_i32_0 = arith.constant 0 : i32
    %c0_i32_1 = arith.constant 0 : i32
    return %c0_i32, %c0_i32_0 : i32, i32
  }
  func.func @transform_6(%arg0: i32) -> i32 {
    %c0_i32 = arith.constant 0 : i32
    %c0_i32_0 = arith.constant 0 : i32
    return %c0_i32 : i32
  }
  func.func @transform_7(%arg0: i32) -> (i32, i32) {
    %c0_i32 = arith.constant 0 : i32
    %c0_i32_0 = arith.constant 0 : i32
    return %c0_i32, %arg0 : i32, i32
  }
}

</mosaic_0001>

<llo_original>
// kernel: critic_forward.1
$region0: #{critic_forward.1}
  #allocation0 [shape = 'u32[]', space=smem, size = 0x4, offset = 0x4, fixed_abs, tag = 'smem constant byte address 0x4 - core index']
  #allocation1 [shape = 'u32[144,128]{1,0:T(1,128)}', space=vmem, size = 0x12000, scoped, tag = 'internal scratch']
  #allocation2 [shape = 'f32[1]{0:T(128)S(6)}', space=smem, size = 0x200, scoped, tag = 'scoped memory for critic_forward.1']
  %s0 = inlined_call_operand.hbm [shape: f32[8,16], index: 0, kind: input, shape index: {}]
  %s1 = inlined_call_operand.vmem [shape: f32[16,32], index: 1, kind: input, shape index: {}]
  %s2 = inlined_call_operand.vmem [shape: f32[1,32], index: 2, kind: input, shape index: {}]
  %s3 = inlined_call_operand.hbm [shape: f32[32,32], index: 3, kind: input, shape index: {}]
  %s4 = inlined_call_operand.vmem [shape: f32[1,32], index: 4, kind: input, shape index: {}]
  %s5 = inlined_call_operand.vmem [shape: f32[1,32], index: 5, kind: input, shape index: {}]
  %s6 = inlined_call_operand.<no memory space> [shape: f32[1], index: 6, kind: input, shape index: {}]
  %s7 = inlined_call_operand.hbm [shape: f32[1,8], index: 7, kind: output, shape index: {}]
  %s8 = sld [smem:[#allocation0]]
  $region46: #{critic_forward.1} parent=0
    _
  %s10 = ssub.s32 1, %s8
  %s11 = scalar_select 0, %s10, %s8
  %12 = sst [smem:[#allocation2]] %s6
  $region1: #{critic_forward.1} parent=0
    #allocation3 [shape = 'u8[4096]{0}', space=vmem, size = 0x1000, scoped, tag = 'input window, operand 0, single buffered']
    #allocation4 [shape = 's32[1]{0}', space=sflag, size = 0x4, scoped, tag = 'scoped memory for critic_forward.1']
    #allocation5 [shape = 's32[1]{0}', space=sflag, size = 0x4, scoped, tag = 'scoped memory for critic_forward.1']
    #allocation6 [shape = 'u8[16384]{0}', space=vmem, size = 0x4000, scoped, tag = 'input window, operand 3, single buffered']
    #allocation7 [shape = 's32[1]{0}', space=sflag, size = 0x4, scoped, tag = 'scoped memory for critic_forward.1']
    #allocation8 [shape = 'u8[512]{0}', space=vmem, size = 0x400, scoped, tag = 'output window, operand 0, single buffered']
    %13 = vsyncpa [#allocation4], 0
    %14 = vsyncpa [#allocation7], 0
    %15 = vsyncpa [#allocation5], 0
    // Predicated region
    $region2: #{critic_forward.1} parent=1 // pred_check
      _
    $region3: #{critic_forward.1} parent=1 // pred_check_branch
      %17 = sbr.rel (0) target = $region5
    $region4: #{critic_forward.1} parent=1 // pred_region
      %s19 = ssub.s32 128, 128
      %20 = vsyncadd [#allocation4], %s19
      %s22 = sshll.u32 [#allocation3], 4
      %s23 = int_to_ptr.vmem [resolvable:$true] %s22
      %25 = dma.hbm_to_vmem [thread:$0]  %s0, 128, %s23, [#allocation4]
    $region5: #{critic_forward.1} parent=1 // pred_fallthru
      _
    // Predicated region
    $region6: #{critic_forward.1} parent=1 // pred_check
      _
    $region7: #{critic_forward.1} parent=1 // pred_check_branch
      %27 = sbr.rel (0) target = $region9
    $region8: #{critic_forward.1} parent=1 // pred_region
      _
    $region9: #{critic_forward.1} parent=1 // pred_fallthru
      _
    // Predicated region
    $region10: #{critic_forward.1} parent=1 // pred_check
      _
    $region11: #{critic_forward.1} parent=1 // pred_check_branch
      %29 = sbr.rel (0) target = $region13
    $region12: #{critic_forward.1} parent=1 // pred_region
      _
    $region13: #{critic_forward.1} parent=1 // pred_fallthru
      _
    // Predicated region
    $region14: #{critic_forward.1} parent=1 // pred_check
      _
    $region15: #{critic_forward.1} parent=1 // pred_check_branch
      %31 = sbr.rel (0) target = $region17
    $region16: #{critic_forward.1} parent=1 // pred_region
      %s33 = ssub.s32 512, 512
      %34 = vsyncadd [#allocation7], %s33
      %s35 = sshll.u32 [#allocation6], 4
      %s36 = int_to_ptr.vmem [resolvable:$true] %s35
      %41 = dma.hbm_to_vmem [thread:$0]  %s3, 512, %s36, [#allocation7], 128, 128, 8
    $region17: #{critic_forward.1} parent=1 // pred_fallthru
      _
    // Predicated region
    $region18: #{critic_forward.1} parent=1 // pred_check
      _
    $region19: #{critic_forward.1} parent=1 // pred_check_branch
      %43 = sbr.rel (0) target = $region21
    $region20: #{critic_forward.1} parent=1 // pred_region
      _
    $region21: #{critic_forward.1} parent=1 // pred_fallthru
      _
    // Predicated region
    $region22: #{critic_forward.1} parent=1 // pred_check
      _
    $region23: #{critic_forward.1} parent=1 // pred_check_branch
      %45 = sbr.rel (0) target = $region25
    $region24: #{critic_forward.1} parent=1 // pred_region
      _
    $region25: #{critic_forward.1} parent=1 // pred_fallthru
      _
    // Predicated region
    $region26: #{critic_forward.1} parent=1 // pred_check
      _
    $region27: #{critic_forward.1} parent=1 // pred_check_branch
      %47 = sbr.rel (0) target = $region29
    $region28: #{critic_forward.1} parent=1 // pred_region
      _
    $region29: #{critic_forward.1} parent=1 // pred_fallthru
      _
    // Predicated region
    $region30: #{critic_forward.1} parent=1 // pred_check
      _
    $region31: #{critic_forward.1} parent=1 // pred_check_branch
      %49 = sbr.rel (0) target = $region33
    $region32: #{critic_forward.1} parent=1 // pred_region
      %50 = dma.done [#allocation4], 128
    $region33: #{critic_forward.1} parent=1 // pred_fallthru
      _
    // Predicated region
    $region34: #{critic_forward.1} parent=1 // pred_check
      _
    $region35: #{critic_forward.1} parent=1 // pred_check_branch
      %52 = sbr.rel (0) target = $region37
    $region36: #{critic_forward.1} parent=1 // pred_region
      %53 = dma.done [#allocation7], 512
    $region37: #{critic_forward.1} parent=1 // pred_fallthru
      _
    %v54 = vld [vmem:[#allocation3] sm:$0xff]
    %v55 = vld [vmem:[%s1] sm:$0xff]
    %v56 = vld [vmem:[%s1 + $0x8] sm:$0xff]
    %v57 = vld [vmem:[%s2] sm:$0x1]
    %v59 = vlaneseq
    %v60 = vshrl.u32 %v59, 7
    %v61 = vsub.s32 0, %v60
    %v62 = vrot.slane %v57, %v61
    %vm64 = vcmask 130048
    %v66 = vsel %vm64, %v54, 0
    %68 = vmatprep.subr.mxu0 0.0
    %69 = vmatpush1.msra.mxu0 %v55
    %70 = vmatprep.subr.mxu0 0.0
    %71 = vmatpush1.msra.mxu0 %v56
    %72 = vmatprep.subr.mxu0 0.0
    %73 = vmatpush1.msra.mxu0 0.0
    %74 = vmatprep.subr.mxu0 0.0
    %75 = vmatpush1.msra.mxu0 0.0
    %76 = vmatprep.subr.mxu0 0.0
    %77 = vmatpush1.msra.mxu0 0.0
    %78 = vmatprep.subr.mxu0 0.0
    %79 = vmatpush1.msra.mxu0 0.0
    %80 = vmatprep.subr.mxu0 0.0
    %81 = vmatpush1.msra.mxu0 0.0
    %82 = vmatprep.subr.mxu0 0.0
    %83 = vmatpush1.msra.mxu0 0.0
    %84 = vmatprep.subr.mxu0 0.0
    %85 = vmatpush1.msra.mxu0 0.0
    %86 = vmatprep.subr.mxu0 0.0
    %87 = vmatpush1.msra.mxu0 0.0
    %88 = vmatprep.subr.mxu0 0.0
    %89 = vmatpush1.msra.mxu0 0.0
    %90 = vmatprep.subr.mxu0 0.0
    %91 = vmatpush1.msra.mxu0 0.0
    %92 = vmatprep.subr.mxu0 0.0
    %93 = vmatpush1.msra.mxu0 0.0
    %94 = vmatprep.subr.mxu0 0.0
    %95 = vmatpush1.msra.mxu0 0.0
    %96 = vmatprep.subr.mxu0 0.0
    %97 = vmatpush1.msra.mxu0 0.0
    %98 = vmatprep.subr.mxu0 0.0
    %99 = vmatpush1.msra.mxu0 0.0
    %100 = vmatprep.subr.mxu0 0.0
    %101 = vmatpush1.msra.mxu0 0.0
    %102 = vmatprep.subr.mxu0 0.0
    %103 = vmatpush1.msra.mxu0 0.0
    %104 = vmatprep.subr.mxu0 0.0
    %105 = vmatpush1.msra.mxu0 0.0
    %106 = vmatprep.subr.mxu0 0.0
    %107 = vmatpush1.msra.mxu0 0.0
    %108 = vmatprep.subr.mxu0 0.0
    %109 = vmatpush1.msra.mxu0 0.0
    %110 = vmatprep.subr.mxu0 0.0
    %111 = vmatpush1.msra.mxu0 0.0
    %112 = vmatprep.subr.mxu0 0.0
    %113 = vmatpush1.msra.mxu0 0.0
    %114 = vmatprep.subr.mxu0 0.0
    %115 = vmatpush1.msra.mxu0 0.0
    %116 = vmatprep.subr.mxu0 0.0
    %117 = vmatpush1.msra.mxu0 0.0
    %118 = vmatprep.subr.mxu0 0.0
    %119 = vmatpush1.msra.mxu0 0.0
    %120 = vmatprep.subr.mxu0 0.0
    %121 = vmatpush1.msra.mxu0 0.0
    %122 = vmatprep.subr.mxu0 0.0
    %123 = vmatpush1.msra.mxu0 0.0
    %124 = vmatprep.subr.mxu0 0.0
    %125 = vmatpush1.msra.mxu0 0.0
    %126 = vmatprep.subr.mxu0 0.0
    %127 = vmatpush1.msra.mxu0 0.0
    %128 = vmatprep.subr.mxu0 0.0
    %129 = vmatpush1.msra.mxu0 0.0
    %130 = vmatprep.subr.mxu0 0.0
    %131 = vmatpush1.msra.mxu0 0.0
    %132 = vmatprep.mubr.f32.mxu0 0.0
    %133 = vmatmul.mubr.f32.gmra.mrb[0].mxu0 %v66
    %v134 = vpop.f32.mrb[0].mxu0
    %v135 = vadd.f32 %v62, %v134
    %v136 = vpop.f32.mrb[0].mxu0
    %137 = vdwg.mxu0
    %v138 = vmax.f32 %v135, 0.0
    %v139 = vld [vmem:[#allocation6] sm:$0xff]
    %v140 = vld [vmem:[#allocation6 + $0x8] sm:$0xff]
    %v141 = vld [vmem:[#allocation6 + $0x10] sm:$0xff]
    %v142 = vld [vmem:[#allocation6 + $0x18] sm:$0xff]
    %v143 = vld [vmem:[%s4] sm:$0x1]
    %v145 = vlaneseq
    %v146 = vshrl.u32 %v145, 7
    %v147 = vsub.s32 0, %v146
    %v148 = vrot.slane %v143, %v147
    %vm150 = vcmask 261120
    %v152 = vsel %vm150, %v138, 0
    %154 = vmatprep.subr.mxu0 0.0
    %155 = vmatpush1.msra.mxu0 %v139
    %156 = vmatprep.subr.mxu0 0.0
    %157 = vmatpush1.msra.mxu0 %v140
    %158 = vmatprep.subr.mxu0 0.0
    %159 = vmatpush1.msra.mxu0 %v141
    %160 = vmatprep.subr.mxu0 0.0
    %161 = vmatpush1.msra.mxu0 %v142
    %162 = vmatprep.subr.mxu0 0.0
    %163 = vmatpush1.msra.mxu0 0.0
    %164 = vmatprep.subr.mxu0 0.0
    %165 = vmatpush1.msra.mxu0 0.0
    %166 = vmatprep.subr.mxu0 0.0
    %167 = vmatpush1.msra.mxu0 0.0
    %168 = vmatprep.subr.mxu0 0.0
    %169 = vmatpush1.msra.mxu0 0.0
    %170 = vmatprep.subr.mxu0 0.0
    %171 = vmatpush1.msra.mxu0 0.0
    %172 = vmatprep.subr.mxu0 0.0
    %173 = vmatpush1.msra.mxu0 0.0
    %174 = vmatprep.subr.mxu0 0.0
    %175 = vmatpush1.msra.mxu0 0.0
    %176 = vmatprep.subr.mxu0 0.0
    %177 = vmatpush1.msra.mxu0 0.0
    %178 = vmatprep.subr.mxu0 0.0
    %179 = vmatpush1.msra.mxu0 0.0
    %180 = vmatprep.subr.mxu0 0.0
    %181 = vmatpush1.msra.mxu0 0.0
    %182 = vmatprep.subr.mxu0 0.0
    %183 = vmatpush1.msra.mxu0 0.0
    %184 = vmatprep.subr.mxu0 0.0
    %185 = vmatpush1.msra.mxu0 0.0
    %186 = vmatprep.subr.mxu0 0.0
    %187 = vmatpush1.msra.mxu0 0.0
    %188 = vmatprep.subr.mxu0 0.0
    %189 = vmatpush1.msra.mxu0 0.0
    %190 = vmatprep.subr.mxu0 0.0
    %191 = vmatpush1.msra.mxu0 0.0
    %192 = vmatprep.subr.mxu0 0.0
    %193 = vmatpush1.msra.mxu0 0.0
    %194 = vmatprep.subr.mxu0 0.0
    %195 = vmatpush1.msra.mxu0 0.0
    %196 = vmatprep.subr.mxu0 0.0
    %197 = vmatpush1.msra.mxu0 0.0
    %198 = vmatprep.subr.mxu0 0.0
    %199 = vmatpush1.msra.mxu0 0.0
    %200 = vmatprep.subr.mxu0 0.0
    %201 = vmatpush1.msra.mxu0 0.0
    %202 = vmatprep.subr.mxu0 0.0
    %203 = vmatpush1.msra.mxu0 0.0
    %204 = vmatprep.subr.mxu0 0.0
    %205 = vmatpush1.msra.mxu0 0.0
    %206 = vmatprep.subr.mxu0 0.0
    %207 = vmatpush1.msra.mxu0 0.0
    %208 = vmatprep.subr.mxu0 0.0
    %209 = vmatpush1.msra.mxu0 0.0
    %210 = vmatprep.subr.mxu0 0.0
    %211 = vmatpush1.msra.mxu0 0.0
    %212 = vmatprep.subr.mxu0 0.0
    %213 = vmatpush1.msra.mxu0 0.0
    %214 = vmatprep.subr.mxu0 0.0
    %215 = vmatpush1.msra.mxu0 0.0
    %216 = vmatprep.subr.mxu0 0.0
    %217 = vmatpush1.msra.mxu0 0.0
    %218 = vmatprep.mubr.f32.mxu0 0.0
    %219 = vmatmul.mubr.f32.gmra.mrb[0].mxu0 %v152
    %v220 = vpop.f32.mrb[0].mxu0
    %v221 = vadd.f32 %v148, %v220
    %v222 = vpop.f32.mrb[0].mxu0
    %223 = vdwg.mxu0
    %v224 = vmax.f32 %v221, 0.0
    %v225 = vld [vmem:[%s5] sm:$0x1]
    %s226 = sld [smem:[#allocation2]]
    %v227 = vstv %s226
    %v229 = vsel %vm150, %v225, 0
    %v232 = vsel %vm150, %v224, 0
    %234 = vmatprep.subr.mxu0 0.0
    %235 = vmatpush1.xpose.msra.mxu0 %v232
    %236 = vmatprep.subr.mxu0 0.0
    %237 = vmatpush1.xpose.msra.mxu0 0.0
    %238 = vmatprep.subr.mxu0 0.0
    %239 = vmatpush1.xpose.msra.mxu0 0.0
    %240 = vmatprep.subr.mxu0 0.0
    %241 = vmatpush1.xpose.msra.mxu0 0.0
    %242 = vmatprep.subr.mxu0 0.0
    %243 = vmatpush1.xpose.msra.mxu0 0.0
    %244 = vmatprep.subr.mxu0 0.0
    %245 = vmatpush1.xpose.msra.mxu0 0.0
    %246 = vmatprep.subr.mxu0 0.0
    %247 = vmatpush1.xpose.msra.mxu0 0.0
    %248 = vmatprep.subr.mxu0 0.0
    %249 = vmatpush1.xpose.msra.mxu0 0.0
    %250 = vmatprep.subr.mxu0 0.0
    %251 = vmatpush1.xpose.msra.mxu0 0.0
    %252 = vmatprep.subr.mxu0 0.0
    %253 = vmatpush1.xpose.msra.mxu0 0.0
    %254 = vmatprep.subr.mxu0 0.0
    %255 = vmatpush1.xpose.msra.mxu0 0.0
    %256 = vmatprep.subr.mxu0 0.0
    %257 = vmatpush1.xpose.msra.mxu0 0.0
    %258 = vmatprep.subr.mxu0 0.0
    %259 = vmatpush1.xpose.msra.mxu0 0.0
    %260 = vmatprep.subr.mxu0 0.0
    %261 = vmatpush1.xpose.msra.mxu0 0.0
    %262 = vmatprep.subr.mxu0 0.0
    %263 = vmatpush1.xpose.msra.mxu0 0.0
    %264 = vmatprep.subr.mxu0 0.0
    %265 = vmatpush1.xpose.msra.mxu0 0.0
    %266 = vmatprep.subr.mxu0 0.0
    %267 = vmatpush1.xpose.msra.mxu0 0.0
    %268 = vmatprep.subr.mxu0 0.0
    %269 = vmatpush1.xpose.msra.mxu0 0.0
    %270 = vmatprep.subr.mxu0 0.0
    %271 = vmatpush1.xpose.msra.mxu0 0.0
    %272 = vmatprep.subr.mxu0 0.0
    %273 = vmatpush1.xpose.msra.mxu0 0.0
    %274 = vmatprep.subr.mxu0 0.0
    %275 = vmatpush1.xpose.msra.mxu0 0.0
    %276 = vmatprep.subr.mxu0 0.0
    %277 = vmatpush1.xpose.msra.mxu0 0.0
    %278 = vmatprep.subr.mxu0 0.0
    %279 = vmatpush1.xpose.msra.mxu0 0.0
    %280 = vmatprep.subr.mxu0 0.0
    %281 = vmatpush1.xpose.msra.mxu0 0.0
    %282 = vmatprep.subr.mxu0 0.0
    %283 = vmatpush1.xpose.msra.mxu0 0.0
    %284 = vmatprep.subr.mxu0 0.0
    %285 = vmatpush1.xpose.msra.mxu0 0.0
    %286 = vmatprep.subr.mxu0 0.0
    %287 = vmatpush1.xpose.msra.mxu0 0.0
    %288 = vmatprep.subr.mxu0 0.0
    %289 = vmatpush1.xpose.msra.mxu0 0.0
    %290 = vmatprep.subr.mxu0 0.0
    %291 = vmatpush1.xpose.msra.mxu0 0.0
    %292 = vmatprep.subr.mxu0 0.0
    %293 = vmatpush1.xpose.msra.mxu0 0.0
    %294 = vmatprep.subr.mxu0 0.0
    %295 = vmatpush1.xpose.msra.mxu0 0.0
    %296 = vmatprep.subr.mxu0 0.0
    %297 = vmatpush1.xpose.msra.mxu0 0.0
    %298 = vmatprep.mubr.f32.mxu0 0.0
    %299 = vmatmul.mubr.f32.gmra.mrb[0].mxu0 %v229
    %v300 = vpop.f32.mrb[0].mxu0
    %v301 = vadd.f32 %v227, %v300
    %v302 = vpop.f32.mrb[0].mxu0
    %303 = vdwg.mxu0
    %vm304 = vcmask 57344
    %305 = vst.msk [vmem:[#allocation8] sm:$0x1] %vm304, %v301
    // Predicated region
    $region38: #{critic_forward.1} parent=1 // pred_check
      _
    $region39: #{critic_forward.1} parent=1 // pred_check_branch
      %307 = sbr.rel (0) target = $region41
    $region40: #{critic_forward.1} parent=1 // pred_region
      %s309 = ssub.s32 16, 16
      %310 = vsyncadd [#allocation5], %s309
      %s312 = sshll.u32 [#allocation8], 4
      %s313 = int_to_ptr.vmem [resolvable:$true] %s312
      %315 = dma.vmem_to_hbm [thread:$0]  %s313, 16, %s7, [#allocation5]
    $region41: #{critic_forward.1} parent=1 // pred_fallthru
      _
    // Predicated region
    $region42: #{critic_forward.1} parent=1 // pred_check
      _
    $region43: #{critic_forward.1} parent=1 // pred_check_branch
      %317 = sbr.rel (0) target = $region45
    $region44: #{critic_forward.1} parent=1 // pred_region
      %318 = dma.done [#allocation5], 16
    $region45: #{critic_forward.1} parent=1 // pred_fallthru
      _
    %319 = vsyncpa [#allocation4], 1
    %320 = vsyncpa [#allocation7], 1
    %321 = vsyncpa [#allocation5], 1

</llo_original>
